<compile_context>
chip_gen: v7x
topology: tpu7x:2x2x1
jax: 0.10.0
libtpu: 0.0.40
codegen_flags: <defaults>
</compile_context>

<pallas_src>
import jax
import jax.numpy as jnp
import numpy as np
from jax import lax
from jax.experimental import pallas as pl
from jax.experimental.pallas import tpu as pltpu


# ---------------------------------------------------------------------------
# Tiling / budget helpers (all trace-time Python)
# ---------------------------------------------------------------------------

def _vmem_capacity_bytes(default=64 * 1024 * 1024):
    """Physical VMEM of the local chip; conservative 64 MiB fallback (v7x-safe)."""
    try:
        info = pltpu.get_tpu_info()
    except Exception:
        return default
    for name in ("vmem_capacity_bytes", "vmem_size_bytes", "vmem_bytes"):
        v = getattr(info, name, None)
        if v:
            try:
                return int(v)
            except (TypeError, ValueError):
                pass
    return default


def _choose_hw_block(hw2, target, min_blocks=1):
    """Largest multiple-of-128 divisor of hw2 that is <= target and (if possible)
    yields at least `min_blocks` lane chunks.  Falls back to the full extent."""
    if hw2 % 128 != 0:
        return hw2  # a block equal to the full array dim is always legal
    divs = [d for d in range(128, hw2 + 1, 128) if hw2 % d == 0]
    cands = [d for d in divs if d <= target and hw2 // d >= min_blocks]
    if cands:
        return max(cands)
    cands = [d for d in divs if d <= target]
    if cands:
        return max(cands)
    return hw2


def _choose_blocks(C, M_pad, thw, ksp_bytes, loc_bytes, out_bytes, budget_bytes):
    """Pick (c_blk, tm): c_blk must be C or a multiple-of-8 divisor of C (block
    sublane constraint on the output); tm is a multiple of 8 dividing M_pad,
    sized so the double-buffered working set fits the VMEM budget."""
    c_cands = sorted({C} | {d for d in range(8, C, 8) if C % d == 0}, reverse=True)
    target_tm = min(64, M_pad)
    best = None
    for c_blk in c_cands:
        fixed = thw * (2 * 4                      # inv_b2 block (double-buffered)
                       + 2 * c_blk * out_bytes    # out block (double-buffered)
                       + c_blk * 8 * 4)           # (c_blk, 8, thw) f32 accumulator
        per_m = thw * (2 * c_blk * ksp_bytes + 2 * loc_bytes)   # dbl-buffered inputs
        avail = budget_bytes - fixed
        if avail < 8 * per_m:
            continue
        tm = min(M_pad, (avail // per_m) // 8 * 8)
        while M_pad % tm:
            tm -= 8
        if tm >= target_tm:
            return c_blk, tm
        if best is None or tm > best[1]:
            best = (c_blk, tm)
    if best is not None:
        return best
    return c_cands[-1], 8   # last-resort: rely on the vmem limit headroom


# ---------------------------------------------------------------------------
# Kernel
# ---------------------------------------------------------------------------

def _make_gridding_kernel(n_mb, n_chunks, inv_m, thw):
    unroll = n_chunks if n_chunks <= 8 else 8

    def kernel(inv_b2_ref, loc_ref, ksp_ref, out_ref, acc_ref):
        mb = pl.program_id(3)

        @pl.when(mb == 0)
        def _init():
            acc_ref[...] = jnp.zeros_like(acc_ref)

        # Hoisted, tiny (8, thw) per-step constants: reciprocal widths and the
        # lane-parity mask (even lanes hold x / real, odd lanes y / imag).
        inv_b2 = jnp.broadcast_to(inv_b2_ref[...], (8, thw))
        lane = jax.lax.broadcasted_iota(jnp.int32, (8, thw), 1)
        even = (lane & 1) == 0

        def body(i, carry):
            s0 = pl.multiple_of(i * 8, 8)
            # Gaussian weights for this 8-sample chunk, directly in the
            # interleaved lane layout: q holds (x/bx)^2 on even lanes and
            # (y/by)^2 on odd lanes; the partner lane is fetched via XLU rolls
            # (otherwise idle) so the weight lines up with both (re, im) lanes.
            loc = loc_ref[pl.ds(s0, 8), :].astype(jnp.float32)       # (8, thw)
            q = loc * loc * inv_b2
            nxt = pltpu.roll(q, shift=thw - 1, axis=1)               # q[:, l+1]
            prv = pltpu.roll(q, shift=1, axis=1)                     # q[:, l-1]
            kern = jnp.exp(-(q + jnp.where(even, nxt, prv)))         # (8, thw)

            # Chunkwise fma into the f32 accumulator -- the full (C, tm, thw)
            # product is never materialized and no cross-sublane reduce runs
            # in the hot loop.  bf16 inputs are upcast one chunk at a time.
            ksp = ksp_ref[:, pl.ds(s0, 8), :].astype(jnp.float32)    # (c_blk, 8, thw)
            acc_ref[...] += ksp * kern[None, :, :]
            return carry

        lax.fori_loop(0, n_chunks, body, 0, unroll=unroll)

        @pl.when(mb == n_mb - 1)
        def _finalize():
            # Single 8-way sublane reduce per output block, then the mean as a
            # multiply by the static 1/M constant (no divide).
            red = jnp.sum(acc_ref[...], axis=1)                      # (c_blk, thw)
            out_ref[...] = (red * inv_m).astype(out_ref.dtype)

    return kernel


# ---------------------------------------------------------------------------
# Wrapper
# ---------------------------------------------------------------------------

def gaussian_gridding_forward(ksp_ri, loc_xy, b_param):
    """ksp_ri: (B, C, M, H, W, 2), loc_xy: (B, M, H, W, 2), b_param: (H, W, 2)."""
    B, C, M, H, W, R = ksp_ri.shape
    assert R == 2
    assert loc_xy.shape == (B, M, H, W, 2)
    assert b_param.shape == (H, W, 2)
    HW2 = H * W * 2

    # Generation-aware VMEM budget: ~112 MiB limit on 128 MiB chips (v5e/v6e),
    # ~56 MiB on 64 MiB chips (v7x); block sizes derived from 3/4 of that.
    vmem_cap = _vmem_capacity_bytes()
    vmem_limit = min((vmem_cap * 7) // 8, vmem_cap - 8 * 1024 * 1024)
    block_budget = (vmem_limit * 3) // 4
    small_vmem = vmem_cap <= 64 * 1024 * 1024

    # Lane-dense spatial chunk (multiple of 128).  Smaller target on 64 MiB
    # chips so tm stays healthy; when B == 1, split the spatial axis so the two
    # v7x TensorCores both get parallel blocks.
    hw_target = 2048 if small_vmem else 4096
    min_hw_blocks = 2 if (B == 1 and small_vmem) else 1
    thw = _choose_hw_block(HW2, hw_target, min_hw_blocks)
    assert thw % 2 == 0  # (x, y) / (re, im) pairs never straddle a lane chunk
    n_hw = HW2 // thw

    # Free, contiguous trailing-dim reshapes only -- no HBM relayout of ksp.
    ksp = ksp_ri.reshape(B, C, M, HW2)
    loc = loc_xy.reshape(B, M, HW2)

    # Pad M up to a multiple of 8 when needed: padded samples have ksp == 0 so
    # they contribute nothing, and the mean still divides by the original M.
    M_pad = ((M + 7) // 8) * 8
    if M_pad != M:
        ksp = jnp.pad(ksp, ((0, 0), (0, 0), (0, M_pad - M), (0, 0)))
        loc = jnp.pad(loc, ((0, 0), (0, M_pad - M), (0, 0)))

    # Tiny parameter: fold the per-element divides into a reciprocal square.
    inv_b2 = (1.0 / jnp.square(b_param.astype(jnp.float32))).reshape(1, HW2)

    ksp_bytes = jnp.dtype(ksp.dtype).itemsize
    loc_bytes = jnp.dtype(loc.dtype).itemsize
    out_bytes = jnp.dtype(ksp_ri.dtype).itemsize
    c_blk, tm = _choose_blocks(C, M_pad, thw, ksp_bytes, loc_bytes, out_bytes,
                               block_budget)
    n_c = C // c_blk
    n_mb = M_pad // tm
    n_chunks = tm // 8

    grid_spec = pltpu.PrefetchScalarGridSpec(
        num_scalar_prefetch=0,
        grid=(B, n_c, n_hw, n_mb),       # reduction (M) axis last
        in_specs=[
            pl.BlockSpec((1, thw), lambda n, c, h, mb: (0, h)),                      # inv_b2
            pl.BlockSpec((None, tm, thw), lambda n, c, h, mb: (n, mb, h)),           # loc
            pl.BlockSpec((None, c_blk, tm, thw), lambda n, c, h, mb: (n, c, mb, h)),  # ksp
        ],
        out_specs=pl.BlockSpec((None, c_blk, thw), lambda n, c, h, mb: (n, c, h)),
        scratch_shapes=[pltpu.VMEM((c_blk, 8, thw), jnp.float32)],
    )

    out = pl.pallas_call(
        _make_gridding_kernel(n_mb, n_chunks, 1.0 / M, thw),
        out_shape=jax.ShapeDtypeStruct((B, C, HW2), ksp_ri.dtype),
        grid_spec=grid_spec,
        compiler_params=pltpu.CompilerParams(
            dimension_semantics=("parallel", "parallel", "parallel", "arbitrary"),
            vmem_limit_bytes=vmem_limit,
        ),
    )(inv_b2, loc, ksp)

    # Cheap trailing-dim reshape of the small output back to (B, C, H, W, 2).
    return out.reshape(B, C, H, W, 2)


# ---------------------------------------------------------------------------
# Parameter init + pure-JAX reference + smoke test
# ---------------------------------------------------------------------------

def init_b_param(H, W, s=0.0002, bias=1.0):
    """Deterministic init matching GaussianGriddingKernels.reset_kernel_params."""
    i = jnp.arange(H, dtype=jnp.float32)[:, None]
    j = jnp.arange(W, dtype=jnp.float32)[None, :]
    r = jnp.sqrt((i - H // 2) ** 2 + (j - W // 2) ** 2)
    val = s * r + bias
    return jnp.stack([val, val], axis=-1)                 # (H, W, 2)


def reference_forward(ksp_ri, loc_xy, b_param):
    """Pure-JAX reference mirroring the PyTorch forward."""
    x = loc_xy[..., 0]
    y = loc_xy[..., 1]
    bx = b_param[None, None, :, :, 0]
    by = b_param[None, None, :, :, 1]
    kern = jnp.exp(-((x / bx) ** 2 + (y / by) ** 2))       # (B, M, H, W)
    kern = kern[:, None, :, :, :, None]                    # (B, 1, M, H, W, 1)
    return jnp.mean(ksp_ri * kern, axis=2)                 # (B, C, H, W, 2)


if __name__ == "__main__":
    B, C, M, H, W = 2, 4, 8, 16, 16

    key = jax.random.PRNGKey(0)
    k1, k2 = jax.random.split(key)
    ksp_ri = jax.random.normal(k1, (B, C, M, H, W, 2), dtype=jnp.float32)
    loc_xy = jax.random.normal(k2, (B, M, H, W, 2), dtype=jnp.float32)
    b_param = init_b_param(H, W)

    out = gaussian_gridding_forward(ksp_ri, loc_xy, b_param)
    out = jax.block_until_ready(out)

    ref = reference_forward(ksp_ri, loc_xy, b_param)
    assert out.shape == (B, C, H, W, 2), out.shape
    np.testing.assert_allclose(np.asarray(out), np.asarray(ref), rtol=1e-5, atol=1e-5)

    print("KERNEL_OK")
</pallas_src>

<mosaic_0001>
module attributes {stable_mosaic.version = 11 : i64} {
  func.func @kernel(%arg0: i32, %arg1: i32, %arg2: i32, %arg3: i32, %arg4: memref<1x512xf32, #tpu.memory_space<vmem>>, %arg5: memref<1x8x512xf32, #tpu.memory_space<vmem>>, %arg6: memref<1x4x8x512xf32, #tpu.memory_space<vmem>>, %arg7: memref<1x4x512xf32, #tpu.memory_space<vmem>>, %arg8: memref<4x8x512xf32, #tpu.memory_space<vmem>>) attributes {dimension_semantics = [#tpu.dimension_semantics<parallel>, #tpu.dimension_semantics<parallel>, #tpu.dimension_semantics<parallel>, #tpu.dimension_semantics<arbitrary>], iteration_bounds = array<i64: 2, 1, 1, 1>, scalar_prefetch = 0 : i64, scratch_operands = 1 : i64, tpu.core_type = #tpu.core_type<tc>, window_params = [{transform_indices = @transform_0, window_bounds = array<i64: 1, 512>}, {transform_indices = @transform_1, window_bounds = array<i64: 1, 8, 512>}, {transform_indices = @transform_2, window_bounds = array<i64: 1, 4, 8, 512>}, {transform_indices = @transform_3, window_bounds = array<i64: 1, 4, 512>}]} {
    %c0_i32 = arith.constant 0 : i32
    %0 = arith.cmpi eq, %arg3, %c0_i32 : i32
    %1 = arith.extui %0 : i1 to i32
    %c0_i32_0 = arith.constant 0 : i32
    %2 = arith.cmpi ne, %1, %c0_i32_0 : i32
    scf.if %2 {
      %cst_19 = arith.constant 0.000000e+00 : f32
      %37 = vector.broadcast %cst_19 : f32 to vector<4x8x512xf32>
      %c0_20 = arith.constant 0 : index
      %c0_21 = arith.constant 0 : index
      %c0_22 = arith.constant 0 : index
      %38 = vector.load %arg8[%c0_20, %c0_21, %c0_22] : memref<4x8x512xf32, #tpu.memory_space<vmem>>, vector<4x8x512xf32>
      tpu.vector_store %arg8[%c0_20, %c0_21, %c0_22], %37 {strides = array<i32>} : memref<4x8x512xf32, #tpu.memory_space<vmem>>, vector<4x8x512xf32>,
    } else {
    }
    %c0 = arith.constant 0 : index
    %c0_1 = arith.constant 0 : index
    %3 = vector.load %arg4[%c0, %c0_1] : memref<1x512xf32, #tpu.memory_space<vmem>>, vector<1x512xf32>
    %4 = vector.shape_cast %3 : vector<1x512xf32> to vector<1x512xf32>
    %5 = vector.broadcast %4 : vector<1x512xf32> to vector<8x512xf32>
    %6 = tpu.iota {dimensions = array<i32: 1>} : vector<8x512xi32>
    %c1_i32 = arith.constant 1 : i32
    %7 = vector.broadcast %c1_i32 : i32 to vector<8x512xi32>
    %8 = arith.andi %6, %7 : vector<8x512xi32>
    %c0_i32_2 = arith.constant 0 : i32
    %9 = vector.broadcast %c0_i32_2 : i32 to vector<8x512xi32>
    %10 = arith.cmpi eq, %8, %9 : vector<8x512xi32>
    %c0_i32_3 = arith.constant 0 : i32
    %c8_i32 = arith.constant 8 : i32
    %11 = arith.muli %c0_i32_3, %c8_i32 : i32
    %12 = tpu.assume_multiple %11, 8 : i32
    %c0_4 = arith.constant 0 : index
    %13 = arith.index_cast %12 : i32 to index
    %c0_5 = arith.constant 0 : index
    %14 = vector.load %arg5[%c0_4, %13, %c0_5] : memref<1x8x512xf32, #tpu.memory_space<vmem>>, vector<1x8x512xf32>
    %15 = vector.shape_cast %14 : vector<1x8x512xf32> to vector<8x512xf32>
    %16 = arith.mulf %15, %15 : vector<8x512xf32>
    %17 = arith.mulf %16, %5 : vector<8x512xf32>
    %c511_i32 = arith.constant 511 : i32
    %18 = tpu.dynamic_rotate %17 by %c511_i32 dim 1 : vector<8x512xf32>, i32 -> vector<8x512xf32>
    %c1_i32_6 = arith.constant 1 : i32
    %19 = tpu.dynamic_rotate %17 by %c1_i32_6 dim 1 : vector<8x512xf32>, i32 -> vector<8x512xf32>
    %20 = arith.select %10, %18, %19 : vector<8x512xi1>, vector<8x512xf32>
    %21 = arith.addf %17, %20 : vector<8x512xf32>
    %cst = arith.constant 0.000000e+00 : f32
    %22 = vector.broadcast %cst : f32 to vector<8x512xf32>
    %23 = arith.subf %22, %21 : vector<8x512xf32>
    %24 = math.exp %23 : vector<8x512xf32>
    %c0_7 = arith.constant 0 : index
    %c0_8 = arith.constant 0 : index
    %25 = arith.index_cast %12 : i32 to index
    %c0_9 = arith.constant 0 : index
    %26 = vector.load %arg6[%c0_7, %c0_8, %25, %c0_9] : memref<1x4x8x512xf32, #tpu.memory_space<vmem>>, vector<1x4x8x512xf32>
    %27 = vector.shape_cast %26 : vector<1x4x8x512xf32> to vector<4x8x512xf32>
    %c0_10 = arith.constant 0 : index
    %c0_11 = arith.constant 0 : index
    %c0_12 = arith.constant 0 : index
    %28 = vector.load %arg8[%c0_10, %c0_11, %c0_12] : memref<4x8x512xf32, #tpu.memory_space<vmem>>, vector<4x8x512xf32>
    %29 = vector.shape_cast %24 : vector<8x512xf32> to vector<1x8x512xf32>
    %30 = vector.broadcast %29 : vector<1x8x512xf32> to vector<4x8x512xf32>
    %31 = arith.mulf %27, %30 : vector<4x8x512xf32>
    %32 = arith.addf %28, %31 : vector<4x8x512xf32>
    %c0_13 = arith.constant 0 : index
    %c0_14 = arith.constant 0 : index
    %c0_15 = arith.constant 0 : index
    %33 = vector.load %arg8[%c0_13, %c0_14, %c0_15] : memref<4x8x512xf32, #tpu.memory_space<vmem>>, vector<4x8x512xf32>
    tpu.vector_store %arg8[%c0_13, %c0_14, %c0_15], %32 {strides = array<i32>} : memref<4x8x512xf32, #tpu.memory_space<vmem>>, vector<4x8x512xf32>,
    %c1_i32_16 = arith.constant 1 : i32
    %c0_i32_17 = arith.constant 0 : i32
    %34 = arith.cmpi eq, %arg3, %c0_i32_17 : i32
    %35 = arith.extui %34 : i1 to i32
    %c0_i32_18 = arith.constant 0 : i32
    %36 = arith.cmpi ne, %35, %c0_i32_18 : i32
    scf.if %36 {
      %c0_19 = arith.constant 0 : index
      %c0_20 = arith.constant 0 : index
      %c0_21 = arith.constant 0 : index
      %37 = vector.load %arg8[%c0_19, %c0_20, %c0_21] : memref<4x8x512xf32, #tpu.memory_space<vmem>>, vector<4x8x512xf32>
      %cst_22 = arith.constant dense<0.000000e+00> : vector<4x512xf32>
      %38 = vector.multi_reduction <add>, %37, %cst_22 [1] : vector<4x8x512xf32> to vector<4x512xf32>
      %cst_23 = arith.constant 1.250000e-01 : f32
      %39 = vector.broadcast %cst_23 : f32 to vector<4x512xf32>
      %40 = arith.mulf %38, %39 : vector<4x512xf32>
      %c0_24 = arith.constant 0 : index
      %c0_25 = arith.constant 0 : index
      %c0_26 = arith.constant 0 : index
      %41 = vector.load %arg7[%c0_24, %c0_25, %c0_26] : memref<1x4x512xf32, #tpu.memory_space<vmem>>, vector<1x4x512xf32>
      %42 = vector.shape_cast %41 : vector<1x4x512xf32> to vector<4x512xf32>
      %43 = vector.shape_cast %40 : vector<4x512xf32> to vector<1x4x512xf32>
      tpu.vector_store %arg7[%c0_24, %c0_25, %c0_26], %43 {strides = array<i32>} : memref<1x4x512xf32, #tpu.memory_space<vmem>>, vector<1x4x512xf32>,
    } else {
    }
    return
  }
  func.func @transform_0(%arg0: i32, %arg1: i32, %arg2: i32, %arg3: i32) -> (i32, i32) {
    %c0_i32 = arith.constant 0 : i32
    %c0_i32_0 = arith.constant 0 : i32
    return %c0_i32, %arg2 : i32, i32
  }
  func.func @transform_1(%arg0: i32, %arg1: i32, %arg2: i32, %arg3: i32) -> (i32, i32, i32) {
    %c0_i32 = arith.constant 0 : i32
    return %arg0, %arg3, %arg2 : i32, i32, i32
  }
  func.func @transform_2(%arg0: i32, %arg1: i32, %arg2: i32, %arg3: i32) -> (i32, i32, i32, i32) {
    %c0_i32 = arith.constant 0 : i32
    return %arg0, %arg1, %arg3, %arg2 : i32, i32, i32, i32
  }
  func.func @transform_3(%arg0: i32, %arg1: i32, %arg2: i32, %arg3: i32) -> (i32, i32, i32) {
    %c0_i32 = arith.constant 0 : i32
    return %arg0, %arg1, %arg2 : i32, i32, i32
  }
}

</mosaic_0001>

<llo_original>
// kernel: tpu_custom_call.1
$region0: #{tpu_custom_call.1}
  #allocation0 [shape = 'u32[]', space=smem, size = 0x4, offset = 0x4, fixed_abs, tag = 'smem constant byte address 0x4 - core index']
  #allocation1 [shape = 'u32[144,128]{1,0:T(1,128)}', space=vmem, size = 0x12000, scoped, tag = 'internal scratch']
  #allocation2 [shape = 'f32[4,8,512]{2,1,0:T(8,128)}', space=vmem, size = 0x10000, scoped, tag = 'scratch operand']
  %s0 = inlined_call_operand.hbm [shape: f32[1,512], index: 0, kind: input, shape index: {}]
  %s1 = inlined_call_operand.hbm [shape: f32[2,8,512], index: 1, kind: input, shape index: {}]
  %s2 = inlined_call_operand.hbm [shape: f32[2,4,8,512], index: 2, kind: input, shape index: {}]
  %s3 = inlined_call_operand.hbm [shape: f32[2,4,512], index: 3, kind: output, shape index: {}]
  %s4 = sld [smem:[#allocation0]]
  $region65: #{tpu_custom_call.1} parent=0
    _
  %s6 = ssub.s32 1, %s4
  %s7 = scalar_select 0, %s6, %s4
  $region1: #{tpu_custom_call.1} parent=0
    #allocation3 [shape = 'u8[2048]{0}', space=vmem, size = 0x800, scoped, tag = 'input window, operand 0, single buffered']
    #allocation4 [shape = 's32[2]{0}', space=sflag, size = 0x8, scoped, tag = 'scoped memory for tpu_custom_call.1']
    #allocation5 [shape = 's32[2]{0}', space=sflag, size = 0x8, scoped, tag = 'scoped memory for tpu_custom_call.1']
    #allocation6 [shape = 'u8[32768]{0}', space=vmem, size = 0x8000, scoped, tag = 'input window, operand 1']
    #allocation7 [shape = 's32[2]{0}', space=sflag, size = 0x8, scoped, tag = 'scoped memory for tpu_custom_call.1']
    #allocation8 [shape = 'u8[131072]{0}', space=vmem, size = 0x20000, scoped, tag = 'input window, operand 2']
    #allocation9 [shape = 'u8[16384]{0}', space=vmem, size = 0x4000, scoped, tag = 'output window, operand 0']
    %8 = vsyncpa [#allocation4], 0
    %9 = vsyncpa [#allocation7], 0
    %s10 = scalar_lea.sflag [#allocation7], 1
    %11 = vsyncpa %s10, 0
    %12 = vsyncpa [#allocation5], 0
    %s13 = scalar_lea.sflag [#allocation5], 1
    %14 = vsyncpa %s13, 0
    loop: start=0, step=1, limit=4
    $region2: #{tpu_custom_call.1} parent=1 // loop_pre_header
      _
    $region3: #{tpu_custom_call.1} parent=1 // loop_header
      %s16 = sphi 0, %s20
      %p17 = scmp.ge.s32.totalorder %s16, 4
      %s23 = sphi 0, %s49
      %s24 = sphi 0, %s45
      %s25 = sphi 0, %s41
      %s26 = sphi 0, %s37
      %s27 = sphi 0, %s23
      %s28 = sphi 0, %s24
      %s29 = sphi 0, %s25
      %s30 = sphi 0, %s26
      %s31 = sphi 0, %s27
      %s32 = sphi 0, %s28
      %s33 = sphi 0, %s29
      %s34 = sphi 0, %s30
      %s52 = sphi 0, %s54
      %s55 = sphi 0, %s52
      %s56 = sphi 0, %s55
      %s72 = sphi 0, %s56
      %s82 = sphi 0, %s84
      %s85 = sphi 0, %s82
      %s86 = sphi 0, %s85
      %s102 = sphi 0, %s86
      %s114 = sphi 0, %s116
      %s117 = sphi 0, %s114
      %s118 = sphi 0, %s117
      %s134 = sphi 0, %s118
      %s144 = sphi 0, %s146
      %s147 = sphi 0, %s144
      %s148 = sphi 0, %s147
      %s164 = sphi 0, %s148
    $region4: #{tpu_custom_call.1} parent=1 // loop_header_branch
      %19 = sbr.rel (%p17) target = $region8
    $region5: #{tpu_custom_call.1} parent=1 // loop_body
      %s21 = ssub.s32 %s16, 1
      %s22 = ssub.s32 %s16, 2
      %s35 = sadd.s32 1, %s26
      %p36 = scmp.ge.s32.totalorder %s35, 1
      %s37 = scalar_select %p36, 0, %s35
      %s38 = sadd.s32 1, %s25
      %s39 = scalar_select %p36, %s38, %s25
      %p40 = scmp.ge.s32.totalorder %s39, 1
      %s41 = scalar_select %p40, 0, %s39
      %s42 = sadd.s32 1, %s24
      %s43 = scalar_select %p40, %s42, %s24
      %p44 = scmp.ge.s32.totalorder %s43, 1
      %s45 = scalar_select %p44, 0, %s43
      %s46 = sadd.s32 1, %s23
      %s47 = scalar_select %p44, %s46, %s23
      %p48 = scmp.ge.s32.totalorder %s47, 2
      %s49 = scalar_select %p48, 0, %s47
      %s50 = ssub.s32 %s25, %s41
      %p51 = scmp.eq.s32.totalorder %s50, 0
      %s53 = sadd.s32 %s52, 1
      %s54 = scalar_select %p51, %s52, %s53
      %p57 = pneg %p51
      %p58 = scmp.eq.s32.totalorder %s16, 1
      %p59 = por %p57, %p58
      %p60 = scmp.ne.s32.totalorder %s52, %s55
      %p61 = scmp.eq.s32.totalorder %s16, 0
      %p62 = por %p60, %p61
      %p63 = scmp.ne.s32.totalorder %s52, %s55
      %p64 = scmp.eq.s32.totalorder %s21, 1
      %p65 = por %p63, %p64
      %p66 = scmp.ne.s32.totalorder %s55, %s56
      %p67 = scmp.eq.s32.totalorder %s21, 0
      %p68 = por %p66, %p67
      %p69 = scmp.ne.s32.totalorder %s55, %s56
      %p70 = scmp.eq.s32.totalorder %s22, 1
      %p71 = por %p69, %p70
      %p73 = scmp.ne.s32.totalorder %s56, %s72
      %p74 = scmp.eq.s32.totalorder %s22, 0
      %p75 = por %p73, %p74
      %s76 = ssub.s32 %s23, %s49
      %s77 = ssub.s32 %s26, %s37
      %s78 = sor.u32 %s76, %s77
      %s79 = ssub.s32 %s25, %s41
      %s80 = sor.u32 %s78, %s79
      %p81 = scmp.eq.s32.totalorder %s80, 0
      %s83 = sadd.s32 %s82, 1
      %s84 = scalar_select %p81, %s82, %s83
      %p87 = pneg %p81
      %p88 = scmp.eq.s32.totalorder %s16, 1
      %p89 = por %p87, %p88
      %p90 = scmp.ne.s32.totalorder %s82, %s85
      %p91 = scmp.eq.s32.totalorder %s16, 0
      %p92 = por %p90, %p91
      %p93 = scmp.ne.s32.totalorder %s82, %s85
      %p94 = scmp.eq.s32.totalorder %s21, 1
      %p95 = por %p93, %p94
      %p96 = scmp.ne.s32.totalorder %s85, %s86
      %p97 = scmp.eq.s32.totalorder %s21, 0
      %p98 = por %p96, %p97
      %p99 = scmp.ne.s32.totalorder %s85, %s86
      %p100 = scmp.eq.s32.totalorder %s22, 1
      %p101 = por %p99, %p100
      %p103 = scmp.ne.s32.totalorder %s86, %s102
      %p104 = scmp.eq.s32.totalorder %s22, 0
      %p105 = por %p103, %p104
      %s106 = ssub.s32 %s23, %s49
      %s107 = ssub.s32 %s24, %s45
      %s108 = sor.u32 %s106, %s107
      %s109 = ssub.s32 %s26, %s37
      %s110 = sor.u32 %s108, %s109
      %s111 = ssub.s32 %s25, %s41
      %s112 = sor.u32 %s110, %s111
      %p113 = scmp.eq.s32.totalorder %s112, 0
      %s115 = sadd.s32 %s114, 1
      %s116 = scalar_select %p113, %s114, %s115
      %p119 = pneg %p113
      %p120 = scmp.eq.s32.totalorder %s16, 1
      %p121 = por %p119, %p120
      %p122 = scmp.ne.s32.totalorder %s114, %s117
      %p123 = scmp.eq.s32.totalorder %s16, 0
      %p124 = por %p122, %p123
      %p125 = scmp.ne.s32.totalorder %s114, %s117
      %p126 = scmp.eq.s32.totalorder %s21, 1
      %p127 = por %p125, %p126
      %p128 = scmp.ne.s32.totalorder %s117, %s118
      %p129 = scmp.eq.s32.totalorder %s21, 0
      %p130 = por %p128, %p129
      %p131 = scmp.ne.s32.totalorder %s117, %s118
      %p132 = scmp.eq.s32.totalorder %s22, 1
      %p133 = por %p131, %p132
      %p135 = scmp.ne.s32.totalorder %s118, %s134
      %p136 = scmp.eq.s32.totalorder %s22, 0
      %p137 = por %p135, %p136
      %s138 = ssub.s32 %s23, %s49
      %s139 = ssub.s32 %s24, %s45
      %s140 = sor.u32 %s138, %s139
      %s141 = ssub.s32 %s25, %s41
      %s142 = sor.u32 %s140, %s141
      %p143 = scmp.eq.s32.totalorder %s142, 0
      %s145 = sadd.s32 %s144, 1
      %s146 = scalar_select %p143, %s144, %s145
      %p149 = pneg %p143
      %p150 = scmp.eq.s32.totalorder %s16, 1
      %p151 = por %p149, %p150
      %p152 = scmp.ne.s32.totalorder %s144, %s147
      %p153 = scmp.eq.s32.totalorder %s16, 0
      %p154 = por %p152, %p153
      %p155 = scmp.ne.s32.totalorder %s144, %s147
      %p156 = scmp.eq.s32.totalorder %s21, 1
      %p157 = por %p155, %p156
      %p158 = scmp.ne.s32.totalorder %s147, %s148
      %p159 = scmp.eq.s32.totalorder %s21, 0
      %p160 = por %p158, %p159
      %p161 = scmp.ne.s32.totalorder %s147, %s148
      %p162 = scmp.eq.s32.totalorder %s22, 1
      %p163 = por %p161, %p162
      %p165 = scmp.ne.s32.totalorder %s148, %s164
      %p166 = scmp.eq.s32.totalorder %s22, 0
      %p167 = por %p165, %p166
      %p168 = scmp.le.s32.totalorder 1, %s16
      %p169 = scmp.lt.s32.totalorder %s16, 3
      %p170 = pnand %p168, %p169
      %p171 = pneg %p170
      // Predicated region
      $region9: #{tpu_custom_call.1} parent=5 // pred_check
        _
      $region10: #{tpu_custom_call.1} parent=5 // pred_check_branch
        %173 = sbr.rel (%p170) target = $region12
      $region11: #{tpu_custom_call.1} parent=5 // pred_region
        %s174 = ssub.s32 %s16, 1
        // Predicated region
        $region13: #{tpu_custom_call.1} parent=11 // pred_check
          %p175 = pneg %p68
        $region14: #{tpu_custom_call.1} parent=11 // pred_check_branch
          %177 = sbr.rel (%p175) target = $region16
        $region15: #{tpu_custom_call.1} parent=11 // pred_region
          %s178 = smul.u32 4, %s29
          %s180 = ssub.s32 64, 64
          %181 = vsyncadd [#allocation4], %s180
          %s182 = smul.addr %s178, 16
          %s183 = scalar_lea.hbm %s0, %s182
          %s185 = sshll.u32 [#allocation3], 4
          %s186 = int_to_ptr.vmem [resolvable:$true] %s185
          %188 = dma.hbm_to_vmem [thread:$0]  %s183, 64, %s186, [#allocation4]
        $region16: #{tpu_custom_call.1} parent=11 // pred_fallthru
          _
      $region12: #{tpu_custom_call.1} parent=5 // pred_fallthru
        _
      %p189 = scmp.lt.s32.totalorder %s16, 2
      // Predicated region
      $region17: #{tpu_custom_call.1} parent=5 // pred_check
        %p190 = pneg %p189
      $region18: #{tpu_custom_call.1} parent=5 // pred_check_branch
        %192 = sbr.rel (%p190) target = $region20
      $region19: #{tpu_custom_call.1} parent=5 // pred_region
        // Predicated region
        $region21: #{tpu_custom_call.1} parent=19 // pred_check
          %p193 = pneg %p92
        $region22: #{tpu_custom_call.1} parent=19 // pred_check_branch
          %195 = sbr.rel (%p193) target = $region24
        $region23: #{tpu_custom_call.1} parent=19 // pred_region
          %s196 = sand.u32 %s16, 1
          %s197 = scalar_lea.sflag [#allocation7], %s196
          %s198 = sand.u32 %s82, 1
          %s199 = smul.addr %s198, 32
          %s200 = scalar_lea.vmem [#allocation6], %s199
          %s201 = smul.u32 4, %s25
          %s203 = ssub.s32 512, 512
          %204 = vsyncadd %s197, %s203
          %s205 = smul.addr %s26, 4
          %s206 = sadd.s32 %s201, %s205
          %s207 = smul.addr %s23, 4
          %s208 = sadd.s32 %s206, %s207
          %s209 = smul.addr %s208, 128
          %s210 = scalar_lea.hbm %s1, %s209
          %s212 = sshll.u32 %s200, 4
          %s213 = int_to_ptr.vmem [resolvable:$true] %s212
          %215 = dma.hbm_to_vmem [thread:$0]  %s210, 512, %s213, %s197
        $region24: #{tpu_custom_call.1} parent=19 // pred_fallthru
          _
        // Predicated region
        $region25: #{tpu_custom_call.1} parent=19 // pred_check
          %p216 = pneg %p124
        $region26: #{tpu_custom_call.1} parent=19 // pred_check_branch
          %218 = sbr.rel (%p216) target = $region28
        $region27: #{tpu_custom_call.1} parent=19 // pred_region
          %s219 = sand.u32 %s16, 1
          %s220 = scalar_lea.sflag [#allocation7], %s219
          %s221 = sand.u32 %s114, 1
          %s222 = smul.addr %s221, 128
          %s223 = scalar_lea.vmem [#allocation8], %s222
          %s224 = smul.u32 4, %s24
          %s225 = smul.u32 4, %s25
          %s227 = ssub.s32 2048, 2048
          %228 = vsyncadd %s220, %s227
          %s229 = smul.addr %s26, 4
          %s230 = sadd.s32 %s225, %s229
          %s231 = smul.addr %s224, 4
          %s232 = sadd.s32 %s230, %s231
          %s233 = smul.addr %s23, 16
          %s234 = sadd.s32 %s232, %s233
          %s235 = smul.addr %s234, 128
          %s236 = scalar_lea.hbm %s2, %s235
          %s237 = sshll.u32 %s223, 4
          %s238 = int_to_ptr.vmem [resolvable:$true] %s237
          %243 = dma.hbm_to_vmem [thread:$0]  %s236, 2048, %s238, %s220, 512, 512, 32
        $region28: #{tpu_custom_call.1} parent=19 // pred_fallthru
          _
      $region20: #{tpu_custom_call.1} parent=5 // pred_fallthru
        _
      %p244 = scmp.le.s32.totalorder 1, %s16
      %p245 = scmp.lt.s32.totalorder %s16, 3
      %p246 = pnand %p244, %p245
      %p247 = pneg %p246
      // Predicated region
      $region29: #{tpu_custom_call.1} parent=5 // pred_check
        _
      $region30: #{tpu_custom_call.1} parent=5 // pred_check_branch
        %249 = sbr.rel (%p246) target = $region32
      $region31: #{tpu_custom_call.1} parent=5 // pred_region
        %s250 = ssub.s32 %s16, 1
        // Predicated region
        $region33: #{tpu_custom_call.1} parent=31 // pred_check
          %p251 = pneg %p68
        $region34: #{tpu_custom_call.1} parent=31 // pred_check_branch
          %253 = sbr.rel (%p251) target = $region36
        $region35: #{tpu_custom_call.1} parent=31 // pred_region
          %254 = dma.done [#allocation4], 64
        $region36: #{tpu_custom_call.1} parent=31 // pred_fallthru
          _
        %s255 = sand.u32 %s21, 1
        %s256 = scalar_lea.sflag [#allocation7], %s255
        %s257 = sand.u32 %s85, 1
        %s258 = smul.addr %s257, 32
        %s259 = scalar_lea.vmem [#allocation6], %s258
        // Predicated region
        $region37: #{tpu_custom_call.1} parent=31 // pred_check
          %p260 = pneg %p98
        $region38: #{tpu_custom_call.1} parent=31 // pred_check_branch
          %262 = sbr.rel (%p260) target = $region40
        $region39: #{tpu_custom_call.1} parent=31 // pred_region
          %263 = dma.done %s256, 512
        $region40: #{tpu_custom_call.1} parent=31 // pred_fallthru
          _
        %s264 = sand.u32 %s21, 1
        %s265 = scalar_lea.sflag [#allocation7], %s264
        %s266 = sand.u32 %s117, 1
        %s267 = smul.addr %s266, 128
        %s268 = scalar_lea.vmem [#allocation8], %s267
        // Predicated region
        $region41: #{tpu_custom_call.1} parent=31 // pred_check
          %p269 = pneg %p130
        $region42: #{tpu_custom_call.1} parent=31 // pred_check_branch
          %271 = sbr.rel (%p269) target = $region44
        $region43: #{tpu_custom_call.1} parent=31 // pred_region
          %272 = dma.done %s265, 2048
        $region44: #{tpu_custom_call.1} parent=31 // pred_fallthru
          _
        %p273 = pneg %p68
        %p274 = pneg %p65
        %s275 = sand.u32 %s21, 1
        %s276 = scalar_lea.sflag [#allocation7], %s275
        %s277 = sand.u32 %s85, 1
        %s278 = smul.addr %s277, 32
        %s279 = scalar_lea.vmem [#allocation6], %s278
        %p280 = pneg %p98
        %p281 = pneg %p95
        %s282 = sand.u32 %s21, 1
        %s283 = scalar_lea.sflag [#allocation7], %s282
        %s284 = sand.u32 %s117, 1
        %s285 = smul.addr %s284, 128
        %s286 = scalar_lea.vmem [#allocation8], %s285
        %p287 = pneg %p130
        %p288 = pneg %p127
        %p289 = pneg %p160
        %p290 = pneg %p157
        %s291 = sand.u32 %s147, 1
        %s292 = scalar_lea.sflag [#allocation5], %s291
        %s293 = sand.u32 %s147, 1
        %s294 = smul.addr %s293, 16
        %s295 = scalar_lea.vmem [#allocation9], %s294
        %s296 = smul.u32 4, %s29
        %s297 = smul.u32 4, %s29
        %s298 = smul.u32 4, %s28
        %s299 = smul.u32 4, %s29
        %s300 = smul.u32 4, %s29
        %p301 = scmp.eq.s32.totalorder %s30, 0
        // Predicated region
        $region45: #{tpu_custom_call.1} parent=31 // pred_check
          %p302 = pneg %p301
        $region46: #{tpu_custom_call.1} parent=31 // pred_check_branch
          %304 = sbr.rel (%p302) target = $region48
        $region47: #{tpu_custom_call.1} parent=31 // pred_region
          %305 = vst [vmem:[#allocation2] sm:$0xff] 0.0
          %306 = vst [vmem:[#allocation2 + $0x8] sm:$0xff] 0.0
          %307 = vst [vmem:[#allocation2 + $0x10] sm:$0xff] 0.0
          %308 = vst [vmem:[#allocation2 + $0x18] sm:$0xff] 0.0
          %309 = vst [vmem:[#allocation2 + $0x20] sm:$0xff] 0.0
          %310 = vst [vmem:[#allocation2 + $0x28] sm:$0xff] 0.0
          %311 = vst [vmem:[#allocation2 + $0x30] sm:$0xff] 0.0
          %312 = vst [vmem:[#allocation2 + $0x38] sm:$0xff] 0.0
          %313 = vst [vmem:[#allocation2 + $0x40] sm:$0xff] 0.0
          %314 = vst [vmem:[#allocation2 + $0x48] sm:$0xff] 0.0
          %315 = vst [vmem:[#allocation2 + $0x50] sm:$0xff] 0.0
          %316 = vst [vmem:[#allocation2 + $0x58] sm:$0xff] 0.0
          %317 = vst [vmem:[#allocation2 + $0x60] sm:$0xff] 0.0
          %318 = vst [vmem:[#allocation2 + $0x68] sm:$0xff] 0.0
          %319 = vst [vmem:[#allocation2 + $0x70] sm:$0xff] 0.0
          %320 = vst [vmem:[#allocation2 + $0x78] sm:$0xff] 0.0
        $region48: #{tpu_custom_call.1} parent=31 // pred_fallthru
          _
        %v321 = vld [vmem:[#allocation3] sm:$0xf]
        %v323 = vlaneseq
        %v324 = vshrl.u32 %v323, 7
        %v325 = vsub.s32 0, %v324
        %v326 = vrot.slane %v321, %v325
        %v327 = vlaneseq
        %v328 = vshrl.u32 %v327, 7
        %v329 = vsub.s32 1, %v328
        %v330 = vrot.slane %v321, %v329
        %v331 = vlaneseq
        %v332 = vshrl.u32 %v331, 7
        %v333 = vsub.s32 2, %v332
        %v334 = vrot.slane %v321, %v333
        %v335 = vlaneseq
        %v336 = vshrl.u32 %v335, 7
        %v337 = vsub.s32 3, %v336
        %v338 = vrot.slane %v321, %v337
        %v343 = vlaneseq
        %v344 = vand.u32 %v343, 127
        %v345 = vadd.s32 %v344, 128
        %v346 = vadd.s32 %v344, 256
        %v347 = vadd.s32 %v344, 384
        %v348 = vand.u32 %v344, 1
        %v349 = vand.u32 %v345, 1
        %v350 = vand.u32 %v346, 1
        %v351 = vand.u32 %v347, 1
        %vm352 = vcmp.eq.s32.totalorder %v348, 0
        %vm353 = vcmp.eq.s32.totalorder %v349, 0
        %vm354 = vcmp.eq.s32.totalorder %v350, 0
        %vm355 = vcmp.eq.s32.totalorder %v351, 0
        %s356 = smul.u32 0, 4
        %s357 = smul.addr %s356, 8
        %s358 = scalar_lea.vmem %s259, %s357 [#allocation6]
        %v359 = vld [vmem:[%s358] sm:$0xff]
        %v360 = vld [vmem:[%s358 + $0x8] sm:$0xff]
        %v361 = vld [vmem:[%s358 + $0x10] sm:$0xff]
        %v362 = vld [vmem:[%s358 + $0x18] sm:$0xff]
        %v363 = vmul.f32 %v359, %v359
        %v364 = vmul.f32 %v360, %v360
        %v365 = vmul.f32 %v361, %v361
        %v366 = vmul.f32 %v362, %v362
        %v367 = vmul.f32 %v363, %v326
        %v368 = vmul.f32 %v364, %v330
        %v369 = vmul.f32 %v365, %v334
        %v370 = vmul.f32 %v366, %v338
        %371 = vrot.lane.b32.xlu0 %v367, 127
        %v372 = vpop.permute.xlu0 %371
        %373 = vrot.lane.b32.xlu0 %v368, 127
        %v374 = vpop.permute.xlu0 %373
        %375 = vrot.lane.b32.xlu0 %v369, 127
        %v376 = vpop.permute.xlu0 %375
        %377 = vrot.lane.b32.xlu0 %v370, 127
        %v378 = vpop.permute.xlu0 %377
        %vm379 = vcmp.lt.s32.totalorder %v344, 127
        %v380 = vsel %vm379, %v376, %v378
        %v381 = vsel %vm379, %v374, %v376
        %v382 = vsel %vm379, %v372, %v374
        %v383 = vsel %vm379, %v378, %v372
        %384 = vrot.lane.b32.xlu0 %v367, 1
        %v385 = vpop.permute.xlu0 %384
        %386 = vrot.lane.b32.xlu0 %v368, 1
        %v387 = vpop.permute.xlu0 %386
        %388 = vrot.lane.b32.xlu0 %v369, 1
        %v389 = vpop.permute.xlu0 %388
        %390 = vrot.lane.b32.xlu0 %v370, 1
        %v391 = vpop.permute.xlu0 %390
        %vm392 = vcmp.lt.s32.totalorder %v344, 1
        %v393 = vsel %vm392, %v389, %v391
        %v394 = vsel %vm392, %v387, %v389
        %v395 = vsel %vm392, %v385, %v387
        %v396 = vsel %vm392, %v391, %v385
        %v397 = vsel %vm352, %v382, %v396
        %v398 = vsel %vm353, %v381, %v395
        %v399 = vsel %vm354, %v380, %v394
        %v400 = vsel %vm355, %v383, %v393
        %v401 = vadd.f32 %v367, %v397
        %v402 = vadd.f32 %v368, %v398
        %v403 = vadd.f32 %v369, %v399
        %v404 = vadd.f32 %v370, %v400
        %v405 = vsub.f32 0.0, %v401
        %v406 = vsub.f32 0.0, %v402
        %v407 = vsub.f32 0.0, %v403
        %v408 = vsub.f32 0.0, %v404
        %v409 = vmul.f32 %v405, 1.442695
        %v410 = vpow.pop %v409
        %v411 = vmul.f32 %v406, 1.442695
        %v412 = vpow.pop %v411
        %v413 = vmul.f32 %v407, 1.442695
        %v414 = vpow.pop %v413
        %v415 = vmul.f32 %v408, 1.442695
        %v416 = vpow.pop %v415
        %s417 = smul.addr %s356, 8
        %s418 = scalar_lea.vmem %s268, %s417 [#allocation8]
        %v419 = vld [vmem:[%s418] sm:$0xff]
        %v420 = vld [vmem:[%s418 + $0x8] sm:$0xff]
        %v421 = vld [vmem:[%s418 + $0x10] sm:$0xff]
        %v422 = vld [vmem:[%s418 + $0x18] sm:$0xff]
        %v423 = vld [vmem:[%s418 + $0x20] sm:$0xff]
        %v424 = vld [vmem:[%s418 + $0x28] sm:$0xff]
        %v425 = vld [vmem:[%s418 + $0x30] sm:$0xff]
        %v426 = vld [vmem:[%s418 + $0x38] sm:$0xff]
        %v427 = vld [vmem:[%s418 + $0x40] sm:$0xff]
        %v428 = vld [vmem:[%s418 + $0x48] sm:$0xff]
        %v429 = vld [vmem:[%s418 + $0x50] sm:$0xff]
        %v430 = vld [vmem:[%s418 + $0x58] sm:$0xff]
        %v431 = vld [vmem:[%s418 + $0x60] sm:$0xff]
        %v432 = vld [vmem:[%s418 + $0x68] sm:$0xff]
        %v433 = vld [vmem:[%s418 + $0x70] sm:$0xff]
        %v434 = vld [vmem:[%s418 + $0x78] sm:$0xff]
        %v435 = vld [vmem:[#allocation2] sm:$0xff]
        %v436 = vld [vmem:[#allocation2 + $0x8] sm:$0xff]
        %v437 = vld [vmem:[#allocation2 + $0x10] sm:$0xff]
        %v438 = vld [vmem:[#allocation2 + $0x18] sm:$0xff]
        %v439 = vld [vmem:[#allocation2 + $0x20] sm:$0xff]
        %v440 = vld [vmem:[#allocation2 + $0x28] sm:$0xff]
        %v441 = vld [vmem:[#allocation2 + $0x30] sm:$0xff]
        %v442 = vld [vmem:[#allocation2 + $0x38] sm:$0xff]
        %v443 = vld [vmem:[#allocation2 + $0x40] sm:$0xff]
        %v444 = vld [vmem:[#allocation2 + $0x48] sm:$0xff]
        %v445 = vld [vmem:[#allocation2 + $0x50] sm:$0xff]
        %v446 = vld [vmem:[#allocation2 + $0x58] sm:$0xff]
        %v447 = vld [vmem:[#allocation2 + $0x60] sm:$0xff]
        %v448 = vld [vmem:[#allocation2 + $0x68] sm:$0xff]
        %v449 = vld [vmem:[#allocation2 + $0x70] sm:$0xff]
        %v450 = vld [vmem:[#allocation2 + $0x78] sm:$0xff]
        %v451 = vmul.f32 %v419, %v410
        %v452 = vmul.f32 %v420, %v412
        %v453 = vmul.f32 %v421, %v414
        %v454 = vmul.f32 %v422, %v416
        %v455 = vmul.f32 %v423, %v410
        %v456 = vmul.f32 %v424, %v412
        %v457 = vmul.f32 %v425, %v414
        %v458 = vmul.f32 %v426, %v416
        %v459 = vmul.f32 %v427, %v410
        %v460 = vmul.f32 %v428, %v412
        %v461 = vmul.f32 %v429, %v414
        %v462 = vmul.f32 %v430, %v416
        %v463 = vmul.f32 %v431, %v410
        %v464 = vmul.f32 %v432, %v412
        %v465 = vmul.f32 %v433, %v414
        %v466 = vmul.f32 %v434, %v416
        %v467 = vadd.f32 %v435, %v451
        %v468 = vadd.f32 %v436, %v452
        %v469 = vadd.f32 %v437, %v453
        %v470 = vadd.f32 %v438, %v454
        %v471 = vadd.f32 %v439, %v455
        %v472 = vadd.f32 %v440, %v456
        %v473 = vadd.f32 %v441, %v457
        %v474 = vadd.f32 %v442, %v458
        %v475 = vadd.f32 %v443, %v459
        %v476 = vadd.f32 %v444, %v460
        %v477 = vadd.f32 %v445, %v461
        %v478 = vadd.f32 %v446, %v462
        %v479 = vadd.f32 %v447, %v463
        %v480 = vadd.f32 %v448, %v464
        %v481 = vadd.f32 %v449, %v465
        %v482 = vadd.f32 %v450, %v466
        %483 = vst [vmem:[#allocation2] sm:$0xff] %v467
        %484 = vst [vmem:[#allocation2 + $0x8] sm:$0xff] %v468
        %485 = vst [vmem:[#allocation2 + $0x10] sm:$0xff] %v469
        %486 = vst [vmem:[#allocation2 + $0x18] sm:$0xff] %v470
        %487 = vst [vmem:[#allocation2 + $0x20] sm:$0xff] %v471
        %488 = vst [vmem:[#allocation2 + $0x28] sm:$0xff] %v472
        %489 = vst [vmem:[#allocation2 + $0x30] sm:$0xff] %v473
        %490 = vst [vmem:[#allocation2 + $0x38] sm:$0xff] %v474
        %491 = vst [vmem:[#allocation2 + $0x40] sm:$0xff] %v475
        %492 = vst [vmem:[#allocation2 + $0x48] sm:$0xff] %v476
        %493 = vst [vmem:[#allocation2 + $0x50] sm:$0xff] %v477
        %494 = vst [vmem:[#allocation2 + $0x58] sm:$0xff] %v478
        %495 = vst [vmem:[#allocation2 + $0x60] sm:$0xff] %v479
        %496 = vst [vmem:[#allocation2 + $0x68] sm:$0xff] %v480
        %497 = vst [vmem:[#allocation2 + $0x70] sm:$0xff] %v481
        %498 = vst [vmem:[#allocation2 + $0x78] sm:$0xff] %v482
        // Predicated region
        $region49: #{tpu_custom_call.1} parent=31 // pred_check
          %p499 = pneg %p301
        $region50: #{tpu_custom_call.1} parent=31 // pred_check_branch
          %501 = sbr.rel (%p499) target = $region52
        $region51: #{tpu_custom_call.1} parent=31 // pred_region
          %v502 = vld [vmem:[#allocation2] sm:$0xff]
          %v503 = vld [vmem:[#allocation2 + $0x8] sm:$0xff]
          %v504 = vld [vmem:[#allocation2 + $0x10] sm:$0xff]
          %v505 = vld [vmem:[#allocation2 + $0x18] sm:$0xff]
          %v506 = vld [vmem:[#allocation2 + $0x20] sm:$0xff]
          %v507 = vld [vmem:[#allocation2 + $0x28] sm:$0xff]
          %v508 = vld [vmem:[#allocation2 + $0x30] sm:$0xff]
          %v509 = vld [vmem:[#allocation2 + $0x38] sm:$0xff]
          %v510 = vld [vmem:[#allocation2 + $0x40] sm:$0xff]
          %v511 = vld [vmem:[#allocation2 + $0x48] sm:$0xff]
          %v512 = vld [vmem:[#allocation2 + $0x50] sm:$0xff]
          %v513 = vld [vmem:[#allocation2 + $0x58] sm:$0xff]
          %v514 = vld [vmem:[#allocation2 + $0x60] sm:$0xff]
          %v515 = vld [vmem:[#allocation2 + $0x68] sm:$0xff]
          %v516 = vld [vmem:[#allocation2 + $0x70] sm:$0xff]
          %v517 = vld [vmem:[#allocation2 + $0x78] sm:$0xff]
          %v518 = vrot.slane %v502, 4
          %v519 = vadd.f32 %v502, %v518
          %v520 = vrot.slane %v519, 2
          %v521 = vadd.f32 %v519, %v520
          %v522 = vrot.slane %v521, 1
          %v523 = vadd.f32 %v521, %v522
          %v524 = vrot.slane %v503, 4
          %v525 = vadd.f32 %v503, %v524
          %v526 = vrot.slane %v525, 2
          %v527 = vadd.f32 %v525, %v526
          %v528 = vrot.slane %v527, 1
          %v529 = vadd.f32 %v527, %v528
          %v530 = vrot.slane %v504, 4
          %v531 = vadd.f32 %v504, %v530
          %v532 = vrot.slane %v531, 2
          %v533 = vadd.f32 %v531, %v532
          %v534 = vrot.slane %v533, 1
          %v535 = vadd.f32 %v533, %v534
          %v536 = vrot.slane %v505, 4
          %v537 = vadd.f32 %v505, %v536
          %v538 = vrot.slane %v537, 2
          %v539 = vadd.f32 %v537, %v538
          %v540 = vrot.slane %v539, 1
          %v541 = vadd.f32 %v539, %v540
          %v542 = vrot.slane %v506, 4
          %v543 = vadd.f32 %v506, %v542
          %v544 = vrot.slane %v543, 2
          %v545 = vadd.f32 %v543, %v544
          %v546 = vrot.slane %v545, 1
          %v547 = vadd.f32 %v545, %v546
          %v548 = vrot.slane %v507, 4
          %v549 = vadd.f32 %v507, %v548
          %v550 = vrot.slane %v549, 2
          %v551 = vadd.f32 %v549, %v550
          %v552 = vrot.slane %v551, 1
          %v553 = vadd.f32 %v551, %v552
          %v554 = vrot.slane %v508, 4
          %v555 = vadd.f32 %v508, %v554
          %v556 = vrot.slane %v555, 2
          %v557 = vadd.f32 %v555, %v556
          %v558 = vrot.slane %v557, 1
          %v559 = vadd.f32 %v557, %v558
          %v560 = vrot.slane %v509, 4
          %v561 = vadd.f32 %v509, %v560
          %v562 = vrot.slane %v561, 2
          %v563 = vadd.f32 %v561, %v562
          %v564 = vrot.slane %v563, 1
          %v565 = vadd.f32 %v563, %v564
          %v566 = vrot.slane %v510, 4
          %v567 = vadd.f32 %v510, %v566
          %v568 = vrot.slane %v567, 2
          %v569 = vadd.f32 %v567, %v568
          %v570 = vrot.slane %v569, 1
          %v571 = vadd.f32 %v569, %v570
          %v572 = vrot.slane %v511, 4
          %v573 = vadd.f32 %v511, %v572
          %v574 = vrot.slane %v573, 2
          %v575 = vadd.f32 %v573, %v574
          %v576 = vrot.slane %v575, 1
          %v577 = vadd.f32 %v575, %v576
          %v578 = vrot.slane %v512, 4
          %v579 = vadd.f32 %v512, %v578
          %v580 = vrot.slane %v579, 2
          %v581 = vadd.f32 %v579, %v580
          %v582 = vrot.slane %v581, 1
          %v583 = vadd.f32 %v581, %v582
          %v584 = vrot.slane %v513, 4
          %v585 = vadd.f32 %v513, %v584
          %v586 = vrot.slane %v585, 2
          %v587 = vadd.f32 %v585, %v586
          %v588 = vrot.slane %v587, 1
          %v589 = vadd.f32 %v587, %v588
          %v590 = vrot.slane %v514, 4
          %v591 = vadd.f32 %v514, %v590
          %v592 = vrot.slane %v591, 2
          %v593 = vadd.f32 %v591, %v592
          %v594 = vrot.slane %v593, 1
          %v595 = vadd.f32 %v593, %v594
          %v596 = vrot.slane %v515, 4
          %v597 = vadd.f32 %v515, %v596
          %v598 = vrot.slane %v597, 2
          %v599 = vadd.f32 %v597, %v598
          %v600 = vrot.slane %v599, 1
          %v601 = vadd.f32 %v599, %v600
          %v602 = vrot.slane %v516, 4
          %v603 = vadd.f32 %v516, %v602
          %v604 = vrot.slane %v603, 2
          %v605 = vadd.f32 %v603, %v604
          %v606 = vrot.slane %v605, 1
          %v607 = vadd.f32 %v605, %v606
          %v608 = vrot.slane %v517, 4
          %v609 = vadd.f32 %v517, %v608
          %v610 = vrot.slane %v609, 2
          %v611 = vadd.f32 %v609, %v610
          %v612 = vrot.slane %v611, 1
          %v613 = vadd.f32 %v611, %v612
          %v614 = vmul.f32 %v523, 0.125
          %v615 = vmul.f32 %v529, 0.125
          %v616 = vmul.f32 %v535, 0.125
          %v617 = vmul.f32 %v541, 0.125
          %v618 = vmul.f32 %v547, 0.125
          %v619 = vmul.f32 %v553, 0.125
          %v620 = vmul.f32 %v559, 0.125
          %v621 = vmul.f32 %v565, 0.125
          %v622 = vmul.f32 %v571, 0.125
          %v623 = vmul.f32 %v577, 0.125
          %v624 = vmul.f32 %v583, 0.125
          %v625 = vmul.f32 %v589, 0.125
          %v626 = vmul.f32 %v595, 0.125
          %v627 = vmul.f32 %v601, 0.125
          %v628 = vmul.f32 %v607, 0.125
          %v629 = vmul.f32 %v613, 0.125
          %v646 = vcombine.low %v614, %v615
          %v647 = vcombine.low %v616, %v617
          %v648 = vcombine.low %v618, %v619
          %v649 = vcombine.low %v620, %v621
          %v650 = vcombine.low %v622, %v623
          %v651 = vcombine.low %v624, %v625
          %v652 = vcombine.low %v626, %v627
          %v653 = vcombine.low %v628, %v629
          %v654 = vrot.slane %v648, 7
          %vm655 = vcmask 1041409
          %v656 = vsel %vm655, %v654, %v646
          %vm657 = vcmask 1045509
          %v658 = vsel %vm657, %v654, %v656
          %v659 = vrot.slane %v650, 6
          %vm660 = vcmask 1042434
          %v661 = vsel %vm660, %v659, %v658
          %vm662 = vcmask 1046534
          %v663 = vsel %vm662, %v659, %v661
          %v664 = vrot.slane %v652, 5
          %vm665 = vcmask 1043459
          %v666 = vsel %vm665, %v664, %v663
          %vm667 = vcmask 1047559
          %v668 = vsel %vm667, %v664, %v666
          %v669 = vrot.slane %v649, 7
          %v670 = vsel %vm655, %v669, %v647
          %v671 = vsel %vm657, %v669, %v670
          %v672 = vrot.slane %v651, 6
          %v673 = vsel %vm660, %v672, %v671
          %v674 = vsel %vm662, %v672, %v673
          %v675 = vrot.slane %v653, 5
          %v676 = vsel %vm665, %v675, %v674
          %v677 = vsel %vm667, %v675, %v676
          %680 = vst [vmem:[%s295] sm:$0xff] %v668
          %681 = vst [vmem:[%s295 + $0x8] sm:$0xff] %v677
        $region52: #{tpu_custom_call.1} parent=31 // pred_fallthru
          _
        %s682 = sand.u32 %s147, 1
        %s683 = scalar_lea.sflag [#allocation5], %s682
        %s684 = sand.u32 %s147, 1
        %s685 = smul.addr %s684, 16
        %s686 = scalar_lea.vmem [#allocation9], %s685
        // Predicated region
        $region53: #{tpu_custom_call.1} parent=31 // pred_check
          %p687 = pneg %p157
        $region54: #{tpu_custom_call.1} parent=31 // pred_check_branch
          %689 = sbr.rel (%p687) target = $region56
        $region55: #{tpu_custom_call.1} parent=31 // pred_region
          %s690 = smul.u32 4, %s29
          %s692 = ssub.s32 256, 256
          %693 = vsyncadd %s683, %s692
          %s694 = smul.addr %s28, 4
          %s695 = sadd.s32 %s690, %s694
          %s696 = smul.addr %s27, 4
          %s697 = sadd.s32 %s695, %s696
          %s698 = smul.addr %s697, 64
          %s699 = scalar_lea.hbm %s3, %s698
          %s701 = sshll.u32 %s686, 4
          %s702 = int_to_ptr.vmem [resolvable:$true] %s701
          %704 = dma.vmem_to_hbm [thread:$0]  %s702, 256, %s699, %s683
        $region56: #{tpu_custom_call.1} parent=31 // pred_fallthru
          _
      $region32: #{tpu_custom_call.1} parent=5 // pred_fallthru
        _
      %p705 = scmp.le.s32.totalorder 2, %s16
      // Predicated region
      $region57: #{tpu_custom_call.1} parent=5 // pred_check
        %p706 = pneg %p705
      $region58: #{tpu_custom_call.1} parent=5 // pred_check_branch
        %708 = sbr.rel (%p706) target = $region60
      $region59: #{tpu_custom_call.1} parent=5 // pred_region
        %s709 = ssub.s32 %s16, 2
        // Predicated region
        $region61: #{tpu_custom_call.1} parent=59 // pred_check
          %p710 = pneg %p163
        $region62: #{tpu_custom_call.1} parent=59 // pred_check_branch
          %712 = sbr.rel (%p710) target = $region64
        $region63: #{tpu_custom_call.1} parent=59 // pred_region
          %s713 = sand.u32 %s148, 1
          %s714 = scalar_lea.sflag [#allocation5], %s713
          %s715 = sand.u32 %s148, 1
          %s716 = smul.addr %s715, 16
          %s717 = scalar_lea.vmem [#allocation9], %s716
          %718 = dma.done %s714, 256
        $region64: #{tpu_custom_call.1} parent=59 // pred_fallthru
          _
      $region60: #{tpu_custom_call.1} parent=5 // pred_fallthru
        _
    $region6: #{tpu_custom_call.1} parent=1 // loop_footer
      %s20 = sadd.s32 1, %s16
    $region7: #{tpu_custom_call.1} parent=1 // loop_footer_branch
      %15 = sbr.rel target = $region3
    $region8: #{tpu_custom_call.1} parent=1 // loop_exit
      _
    %719 = vsyncpa [#allocation4], 1
    %s720 = scalar_lea.sflag [#allocation4], 1
    %721 = vsyncpa %s720, 1
    %722 = vsyncpa [#allocation7], 1
    %s723 = scalar_lea.sflag [#allocation7], 1
    %724 = vsyncpa %s723, 1
    %725 = vsyncpa [#allocation5], 1
    %s726 = scalar_lea.sflag [#allocation5], 1
    %727 = vsyncpa %s726, 1

</llo_original>
